<compile_context>
chip_gen: v6e
topology: v6e:2x2x1
jax: 0.10.0
libtpu: 0.0.40
codegen_flags: <defaults>
</compile_context>

<pallas_src>
import jax
import jax.numpy as jnp
from jax.experimental import pallas as pl
from jax.experimental.pallas import tpu as pltpu

LANE = 128        # vreg lane width: last dims padded to multiples of this
SUBLANE = 16      # bf16 sublane packing: batch tiles are multiples of 16
NEG_INF = -1e30   # bias for padded action lanes -> exp underflows to 0
MAX_BATCH_TILE = 512


def _round_up(x, m):
    return ((x + m - 1) // m) * m


def actor_kernel(x_ref, w1_ref, b1_ref, w2_ref, b2_ref, w3_ref, b3_ref, o_ref):
    """fc1 -> ReLU -> fc2 -> ReLU -> fc3 -> softmax(dim=-1) on one batch tile.

    Weights are (in, out_padded) bf16; MXU matmuls accumulate in f32;
    bias/ReLU/softmax stay f32. Padded action lanes carry bias = NEG_INF so
    they get probability exactly 0 and don't disturb the real softmax.
    """
    w_dtype = w1_ref.dtype
    x = x_ref[...].astype(w_dtype)

    # Layer 1: Linear + ReLU
    h1 = jnp.dot(x, w1_ref[...], preferred_element_type=jnp.float32)
    h1 = jnp.maximum(h1 + b1_ref[...], 0.0)

    # Layer 2: Linear + ReLU
    h2 = jnp.dot(h1.astype(w_dtype), w2_ref[...], preferred_element_type=jnp.float32)
    h2 = jnp.maximum(h2 + b2_ref[...], 0.0)

    # Layer 3: Linear + numerically stable softmax (f32), exact normalization.
    logits = jnp.dot(h2.astype(w_dtype), w3_ref[...], preferred_element_type=jnp.float32)
    logits = logits + b3_ref[...]
    m = jnp.max(logits, axis=-1, keepdims=True)
    e = jnp.exp(logits - m)
    denom = jnp.sum(e, axis=-1, keepdims=True)
    # Exact divide (not approx reciprocal): rows must sum to 1 for downstream
    # sampling, and the kernel is memory-bound so the extra cost is hidden.
    o_ref[...] = (e / denom).astype(o_ref.dtype)


def pad_actor_params(params, *, weight_dtype=jnp.bfloat16):
    """Zero-pad feature dims to 128 lanes and cast weights to `weight_dtype`.

    Layout (lane-dense):
      w1: (state_dim, H_pad)  b1: (1, H_pad)
      w2: (H_pad, H_pad)      b2: (1, H_pad)
      w3: (H_pad, A_pad)      b3: (1, A_pad)  (padded action lanes = NEG_INF)
    """
    w1, b1 = params["w1"], params["b1"].reshape(1, -1)
    w2, b2 = params["w2"], params["b2"].reshape(1, -1)
    w3, b3 = params["w3"], params["b3"].reshape(1, -1)
    state_dim, hidden = w1.shape
    n_actions = w3.shape[1]
    hp = _round_up(hidden, LANE)
    ap = _round_up(n_actions, LANE)

    def pad2(a, rows, cols):
        return jnp.pad(a, ((0, rows - a.shape[0]), (0, cols - a.shape[1])))

    padded = {
        "w1": pad2(w1, state_dim, hp).astype(weight_dtype),
        "b1": pad2(b1, 1, hp).astype(jnp.float32),
        "w2": pad2(w2, hp, hp).astype(weight_dtype),
        "b2": pad2(b2, 1, hp).astype(jnp.float32),
        "w3": pad2(w3, hp, ap).astype(weight_dtype),
        "b3": jnp.concatenate(
            [b3.astype(jnp.float32),
             jnp.full((1, ap - n_actions), NEG_INF, jnp.float32)], axis=1),
    }
    return padded, n_actions


def actor_forward(state, padded_params, n_actions, *, batch_tile=None,
                  out_dtype=jnp.bfloat16, slice_output=True):
    """state: (B, state_dim) f32. padded_params: output of pad_actor_params.

    Returns (B, n_actions) probabilities in `out_dtype`; with
    slice_output=False returns the padded (b_pad, A_pad) block instead
    (padded action lanes are exactly 0, padded rows are garbage).
    """
    B, state_dim = state.shape
    hp = padded_params["w1"].shape[1]
    ap = padded_params["w3"].shape[1]

    # Batch tile: multiple of 16 (bf16 sublane packing). When the batch spans
    # more than one tile we force >= 2 grid steps so the "parallel" axis can
    # shard across both v7x TensorCores; cap at 512 rows to bound f32
    # intermediate spills. Callers can sweep batch_tile per generation.
    if batch_tile is None:
        half = _round_up(pl.cdiv(B, 2), SUBLANE)
        batch_tile = max(SUBLANE, min(half, MAX_BATCH_TILE))
    assert batch_tile % SUBLANE == 0, "batch_tile must be a multiple of 16"

    b_pad = _round_up(B, batch_tile)
    if b_pad != B:
        state = jnp.pad(state, ((0, b_pad - B), (0, 0)))

    grid = (b_pad // batch_tile,)
    rep = lambda i: (0, 0)  # weights/biases resident across the batch grid

    out = pl.pallas_call(
        actor_kernel,
        out_shape=jax.ShapeDtypeStruct((b_pad, ap), out_dtype),
        grid_spec=pltpu.PrefetchScalarGridSpec(
            num_scalar_prefetch=0,
            grid=grid,
            in_specs=[
                pl.BlockSpec((batch_tile, state_dim), lambda i: (i, 0)),  # x
                pl.BlockSpec((state_dim, hp), rep),   # w1
                pl.BlockSpec((1, hp), rep),           # b1
                pl.BlockSpec((hp, hp), rep),          # w2
                pl.BlockSpec((1, hp), rep),           # b2
                pl.BlockSpec((hp, ap), rep),          # w3
                pl.BlockSpec((1, ap), rep),           # b3
            ],
            out_specs=pl.BlockSpec((batch_tile, ap), lambda i: (i, 0)),
        ),
        compiler_params=pltpu.CompilerParams(
            dimension_semantics=("parallel",),
            # No explicit vmem_limit_bytes: footprint is ~1-3 MiB, well under
            # the default scoped limit on v5e/v6e/v7x.
        ),
    )(
        state,
        padded_params["w1"], padded_params["b1"],
        padded_params["w2"], padded_params["b2"],
        padded_params["w3"], padded_params["b3"],
    )
    if slice_output:
        return out[:B, :n_actions]
    return out


def init_actor_params(key, state_dim, hidden_size, n_actions):
    """PyTorch-nn.Linear-style init (uniform +-1/sqrt(fan_in)).
    Weights stored as (in_features, out_features)."""
    keys = jax.random.split(key, 6)

    def linear(kw, kb, fan_in, fan_out):
        bound = 1.0 / jnp.sqrt(jnp.float32(fan_in))
        w = jax.random.uniform(kw, (fan_in, fan_out), jnp.float32, -bound, bound)
        b = jax.random.uniform(kb, (1, fan_out), jnp.float32, -bound, bound)
        return w, b

    w1, b1 = linear(keys[0], keys[1], state_dim, hidden_size)
    w2, b2 = linear(keys[2], keys[3], hidden_size, hidden_size)
    w3, b3 = linear(keys[4], keys[5], hidden_size, n_actions)
    return {"w1": w1, "b1": b1, "w2": w2, "b2": b2, "w3": w3, "b3": b3}


def actor_ref(state, params, *, weight_dtype=jnp.float32):
    """Pure-JAX reference; weight_dtype lets us match the kernel's bf16 matmuls."""
    def lin(x, w, b):
        y = jnp.dot(x.astype(weight_dtype), w.astype(weight_dtype),
                    preferred_element_type=jnp.float32)
        return y + b.reshape(1, -1)

    h1 = jax.nn.relu(lin(state, params["w1"], params["b1"]))
    h2 = jax.nn.relu(lin(h1, params["w2"], params["b2"]))
    logits = lin(h2, params["w3"], params["b3"])
    return jax.nn.softmax(logits, axis=-1)


if __name__ == "__main__":
    key = jax.random.PRNGKey(0)
    k_param, k_state = jax.random.split(key)

    batch = 8
    state_dim = 16
    hidden_size = 32
    n_actions = 8

    params = init_actor_params(k_param, state_dim, hidden_size, n_actions)
    state = jax.random.normal(k_state, (batch, state_dim), jnp.float32)

    padded, n_act = pad_actor_params(params, weight_dtype=jnp.bfloat16)
    out = actor_forward(state, padded, n_act, out_dtype=jnp.bfloat16)
    out = jax.block_until_ready(out)
    out_f32 = out.astype(jnp.float32)

    # Reference with matching bf16 matmul numerics (tight check) and full-f32
    # reference (loose check, covers bf16 rounding of weights and output).
    ref_matched = actor_ref(state, params, weight_dtype=jnp.bfloat16)
    ref_f32 = actor_ref(state, params, weight_dtype=jnp.float32)

    assert out.shape == (batch, n_actions)
    # Exact in-kernel normalization; only the final bf16 output rounding
    # (<= 2^-9 relative) perturbs the row sums.
    assert jnp.allclose(jnp.sum(out_f32, axis=-1), 1.0, atol=5e-3), \
        jnp.sum(out_f32, axis=-1)
    assert jnp.allclose(out_f32, ref_matched, atol=1e-2, rtol=1e-2)
    assert jnp.allclose(out_f32, ref_f32, atol=5e-2)

    print("KERNEL_OK")
</pallas_src>

<mosaic_0001>
module attributes {stable_mosaic.version = 11 : i64} {
  func.func @actor_kernel(%arg0: i32, %arg1: memref<16x16xf32, #tpu.memory_space<vmem>>, %arg2: memref<16x128xbf16, #tpu.memory_space<vmem>>, %arg3: memref<1x128xf32, #tpu.memory_space<vmem>>, %arg4: memref<128x128xbf16, #tpu.memory_space<vmem>>, %arg5: memref<1x128xf32, #tpu.memory_space<vmem>>, %arg6: memref<128x128xbf16, #tpu.memory_space<vmem>>, %arg7: memref<1x128xf32, #tpu.memory_space<vmem>>, %arg8: memref<16x128xbf16, #tpu.memory_space<vmem>>) attributes {dimension_semantics = [#tpu.dimension_semantics<parallel>], iteration_bounds = array<i64: 1>, scalar_prefetch = 0 : i64, scratch_operands = 0 : i64, tpu.core_type = #tpu.core_type<tc>, window_params = [{transform_indices = @transform_0, window_bounds = array<i64: 16, 16>}, {pipeline_mode = #tpu.pipeline_mode<synchronous>, transform_indices = @transform_1, window_bounds = array<i64: 16, 128>}, {pipeline_mode = #tpu.pipeline_mode<synchronous>, transform_indices = @transform_2, window_bounds = array<i64: 1, 128>}, {pipeline_mode = #tpu.pipeline_mode<synchronous>, transform_indices = @transform_3, window_bounds = array<i64: 128, 128>}, {pipeline_mode = #tpu.pipeline_mode<synchronous>, transform_indices = @transform_4, window_bounds = array<i64: 1, 128>}, {pipeline_mode = #tpu.pipeline_mode<synchronous>, transform_indices = @transform_5, window_bounds = array<i64: 128, 128>}, {pipeline_mode = #tpu.pipeline_mode<synchronous>, transform_indices = @transform_6, window_bounds = array<i64: 1, 128>}, {transform_indices = @transform_7, window_bounds = array<i64: 16, 128>}]} {
    %c0 = arith.constant 0 : index
    %c0_0 = arith.constant 0 : index
    %0 = vector.load %arg1[%c0, %c0_0] : memref<16x16xf32, #tpu.memory_space<vmem>>, vector<16x16xf32>
    %1 = arith.truncf %0 : vector<16x16xf32> to vector<16x16xbf16>
    %c0_1 = arith.constant 0 : index
    %c0_2 = arith.constant 0 : index
    %2 = vector.load %arg2[%c0_1, %c0_2] : memref<16x128xbf16, #tpu.memory_space<vmem>>, vector<16x128xbf16>
    %cst = arith.constant dense<0.000000e+00> : vector<16x128xf32>
    %3 = tpu.matmul %1, %2, %cst {dimension_numbers = #tpu.dot_dimension_numbers<[1], [0], [0], [1], [0, 0, 1, 1], [], []>} : vector<16x16xbf16>, vector<16x128xbf16>, vector<16x128xf32> -> vector<16x128xf32>
    %c0_3 = arith.constant 0 : index
    %c0_4 = arith.constant 0 : index
    %4 = vector.load %arg3[%c0_3, %c0_4] : memref<1x128xf32, #tpu.memory_space<vmem>>, vector<1x128xf32>
    %5 = vector.broadcast %4 : vector<1x128xf32> to vector<16x128xf32>
    %6 = arith.addf %3, %5 : vector<16x128xf32>
    %cst_5 = arith.constant 0.000000e+00 : f32
    %7 = vector.broadcast %cst_5 : f32 to vector<16x128xf32>
    %8 = arith.maximumf %6, %7 : vector<16x128xf32>
    %9 = arith.truncf %8 : vector<16x128xf32> to vector<16x128xbf16>
    %c0_6 = arith.constant 0 : index
    %c0_7 = arith.constant 0 : index
    %10 = vector.load %arg4[%c0_6, %c0_7] : memref<128x128xbf16, #tpu.memory_space<vmem>>, vector<128x128xbf16>
    %cst_8 = arith.constant dense<0.000000e+00> : vector<16x128xf32>
    %11 = tpu.matmul %9, %10, %cst_8 {dimension_numbers = #tpu.dot_dimension_numbers<[1], [0], [0], [1], [0, 0, 1, 1], [], []>} : vector<16x128xbf16>, vector<128x128xbf16>, vector<16x128xf32> -> vector<16x128xf32>
    %c0_9 = arith.constant 0 : index
    %c0_10 = arith.constant 0 : index
    %12 = vector.load %arg5[%c0_9, %c0_10] : memref<1x128xf32, #tpu.memory_space<vmem>>, vector<1x128xf32>
    %13 = vector.broadcast %12 : vector<1x128xf32> to vector<16x128xf32>
    %14 = arith.addf %11, %13 : vector<16x128xf32>
    %cst_11 = arith.constant 0.000000e+00 : f32
    %15 = vector.broadcast %cst_11 : f32 to vector<16x128xf32>
    %16 = arith.maximumf %14, %15 : vector<16x128xf32>
    %17 = arith.truncf %16 : vector<16x128xf32> to vector<16x128xbf16>
    %c0_12 = arith.constant 0 : index
    %c0_13 = arith.constant 0 : index
    %18 = vector.load %arg6[%c0_12, %c0_13] : memref<128x128xbf16, #tpu.memory_space<vmem>>, vector<128x128xbf16>
    %cst_14 = arith.constant dense<0.000000e+00> : vector<16x128xf32>
    %19 = tpu.matmul %17, %18, %cst_14 {dimension_numbers = #tpu.dot_dimension_numbers<[1], [0], [0], [1], [0, 0, 1, 1], [], []>} : vector<16x128xbf16>, vector<128x128xbf16>, vector<16x128xf32> -> vector<16x128xf32>
    %c0_15 = arith.constant 0 : index
    %c0_16 = arith.constant 0 : index
    %20 = vector.load %arg7[%c0_15, %c0_16] : memref<1x128xf32, #tpu.memory_space<vmem>>, vector<1x128xf32>
    %21 = vector.broadcast %20 : vector<1x128xf32> to vector<16x128xf32>
    %22 = arith.addf %19, %21 : vector<16x128xf32>
    %cst_17 = arith.constant dense<0xFF800000> : vector<16xf32>
    %23 = vector.multi_reduction <maximumf>, %22, %cst_17 [1] : vector<16x128xf32> to vector<16xf32>
    %24 = vector.shape_cast %23 : vector<16xf32> to vector<16x1xf32>
    %25 = vector.broadcast %24 : vector<16x1xf32> to vector<16x128xf32>
    %26 = arith.subf %22, %25 : vector<16x128xf32>
    %27 = math.exp %26 : vector<16x128xf32>
    %cst_18 = arith.constant dense<0.000000e+00> : vector<16xf32>
    %28 = vector.multi_reduction <add>, %27, %cst_18 [1] : vector<16x128xf32> to vector<16xf32>
    %29 = vector.shape_cast %28 : vector<16xf32> to vector<16x1xf32>
    %30 = vector.broadcast %29 : vector<16x1xf32> to vector<16x128xf32>
    %31 = arith.divf %27, %30 : vector<16x128xf32>
    %32 = arith.truncf %31 : vector<16x128xf32> to vector<16x128xbf16>
    %c0_19 = arith.constant 0 : index
    %c0_20 = arith.constant 0 : index
    %33 = vector.load %arg8[%c0_19, %c0_20] : memref<16x128xbf16, #tpu.memory_space<vmem>>, vector<16x128xbf16>
    tpu.vector_store %arg8[%c0_19, %c0_20], %32 {strides = array<i32>} : memref<16x128xbf16, #tpu.memory_space<vmem>>, vector<16x128xbf16>,
    return
  }
  func.func @transform_0(%arg0: i32) -> (i32, i32) {
    %c0_i32 = arith.constant 0 : i32
    %c0_i32_0 = arith.constant 0 : i32
    return %arg0, %c0_i32 : i32, i32
  }
  func.func @transform_1(%arg0: i32) -> (i32, i32) {
    %c0_i32 = arith.constant 0 : i32
    %c0_i32_0 = arith.constant 0 : i32
    %c0_i32_1 = arith.constant 0 : i32
    return %c0_i32, %c0_i32_0 : i32, i32
  }
  func.func @transform_2(%arg0: i32) -> (i32, i32) {
    %c0_i32 = arith.constant 0 : i32
    %c0_i32_0 = arith.constant 0 : i32
    %c0_i32_1 = arith.constant 0 : i32
    return %c0_i32, %c0_i32_0 : i32, i32
  }
  func.func @transform_3(%arg0: i32) -> (i32, i32) {
    %c0_i32 = arith.constant 0 : i32
    %c0_i32_0 = arith.constant 0 : i32
    %c0_i32_1 = arith.constant 0 : i32
    return %c0_i32, %c0_i32_0 : i32, i32
  }
  func.func @transform_4(%arg0: i32) -> (i32, i32) {
    %c0_i32 = arith.constant 0 : i32
    %c0_i32_0 = arith.constant 0 : i32
    %c0_i32_1 = arith.constant 0 : i32
    return %c0_i32, %c0_i32_0 : i32, i32
  }
  func.func @transform_5(%arg0: i32) -> (i32, i32) {
    %c0_i32 = arith.constant 0 : i32
    %c0_i32_0 = arith.constant 0 : i32
    %c0_i32_1 = arith.constant 0 : i32
    return %c0_i32, %c0_i32_0 : i32, i32
  }
  func.func @transform_6(%arg0: i32) -> (i32, i32) {
    %c0_i32 = arith.constant 0 : i32
    %c0_i32_0 = arith.constant 0 : i32
    %c0_i32_1 = arith.constant 0 : i32
    return %c0_i32, %c0_i32_0 : i32, i32
  }
  func.func @transform_7(%arg0: i32) -> (i32, i32) {
    %c0_i32 = arith.constant 0 : i32
    %c0_i32_0 = arith.constant 0 : i32
    return %arg0, %c0_i32 : i32, i32
  }
}

</mosaic_0001>

<llo_original>
// kernel: tpu_custom_call.1
$region0: #{tpu_custom_call.1}
  #allocation0 [shape = 'u32[]', space=smem, size = 0x4, offset = 0x4, fixed_abs, tag = 'smem constant byte address 0x4 - core index']
  #allocation1 [shape = 'u32[144,128]{1,0:T(1,128)}', space=vmem, size = 0x12000, scoped, tag = 'internal scratch']
  %s0 = inlined_call_operand.hbm [shape: f32[16,16], index: 0, kind: input, shape index: {}]
  %s1 = inlined_call_operand.hbm [shape: bf16[16,128], index: 1, kind: input, shape index: {}]
  %s2 = inlined_call_operand.vmem [shape: f32[1,128], index: 2, kind: input, shape index: {}]
  %s3 = inlined_call_operand.hbm [shape: bf16[128,128], index: 3, kind: input, shape index: {}]
  %s4 = inlined_call_operand.vmem [shape: f32[1,128], index: 4, kind: input, shape index: {}]
  %s5 = inlined_call_operand.hbm [shape: bf16[128,128], index: 5, kind: input, shape index: {}]
  %s6 = inlined_call_operand.vmem [shape: f32[1,128], index: 6, kind: input, shape index: {}]
  %s7 = inlined_call_operand.hbm [shape: bf16[16,128], index: 7, kind: output, shape index: {}]
  %s8 = sld [smem:[#allocation0]]
  $region54: #{tpu_custom_call.1} parent=0
    _
  %s10 = ssub.s32 1, %s8
  %s11 = scalar_select 0, %s10, %s8
  $region1: #{tpu_custom_call.1} parent=0
    #allocation2 [shape = 'u8[8192]{0}', space=vmem, size = 0x2000, scoped, tag = 'input window, operand 0, single buffered']
    #allocation3 [shape = 's32[1]{0}', space=sflag, size = 0x4, scoped, tag = 'scoped memory for tpu_custom_call.1']
    #allocation4 [shape = 's32[1]{0}', space=sflag, size = 0x4, scoped, tag = 'scoped memory for tpu_custom_call.1']
    #allocation5 [shape = 'u8[4096]{0}', space=vmem, size = 0x1000, scoped, tag = 'input window, operand 1, single buffered']
    #allocation6 [shape = 's32[1]{0}', space=sflag, size = 0x4, scoped, tag = 'scoped memory for tpu_custom_call.1']
    #allocation7 [shape = 'u8[32768]{0}', space=vmem, size = 0x8000, scoped, tag = 'input window, operand 3, single buffered']
    #allocation8 [shape = 'u8[32768]{0}', space=vmem, size = 0x8000, scoped, tag = 'input window, operand 5, single buffered']
    #allocation9 [shape = 's32[1]{0}', space=sflag, size = 0x4, scoped, tag = 'scoped memory for tpu_custom_call.1']
    #allocation10 [shape = 'u8[4096]{0}', space=vmem, size = 0x1000, scoped, tag = 'output window, operand 0, single buffered']
    %12 = vsyncpa [#allocation3], 0
    %13 = vsyncpa [#allocation6], 0
    %14 = vsyncpa [#allocation9], 0
    %15 = vsyncpa [#allocation4], 0
    // Predicated region
    $region2: #{tpu_custom_call.1} parent=1 // pred_check
      _
    $region3: #{tpu_custom_call.1} parent=1 // pred_check_branch
      %17 = sbr.rel (0) target = $region5
    $region4: #{tpu_custom_call.1} parent=1 // pred_region
      %s19 = ssub.s32 256, 256
      %20 = vsyncadd [#allocation3], %s19
      %s21 = sshll.u32 [#allocation2], 4
      %s22 = int_to_ptr.vmem [resolvable:$true] %s21
      %27 = dma.hbm_to_vmem [thread:$0]  %s0, 256, %s22, [#allocation3], 128, 128, 8
    $region5: #{tpu_custom_call.1} parent=1 // pred_fallthru
      _
    // Predicated region
    $region6: #{tpu_custom_call.1} parent=1 // pred_check
      _
    $region7: #{tpu_custom_call.1} parent=1 // pred_check_branch
      %29 = sbr.rel (0) target = $region9
    $region8: #{tpu_custom_call.1} parent=1 // pred_region
      %s31 = ssub.s32 128, 128
      %32 = vsyncadd [#allocation6], %s31
      %s33 = sshll.u32 [#allocation5], 4
      %s34 = int_to_ptr.vmem [resolvable:$true] %s33
      %39 = dma.hbm_to_vmem [thread:$0]  %s1, 128, %s34, [#allocation6], 64, 64, 4
    $region9: #{tpu_custom_call.1} parent=1 // pred_fallthru
      _
    // Predicated region
    $region10: #{tpu_custom_call.1} parent=1 // pred_check
      _
    $region11: #{tpu_custom_call.1} parent=1 // pred_check_branch
      %41 = sbr.rel (0) target = $region13
    $region12: #{tpu_custom_call.1} parent=1 // pred_region
      _
    $region13: #{tpu_custom_call.1} parent=1 // pred_fallthru
      _
    // Predicated region
    $region14: #{tpu_custom_call.1} parent=1 // pred_check
      _
    $region15: #{tpu_custom_call.1} parent=1 // pred_check_branch
      %43 = sbr.rel (0) target = $region17
    $region16: #{tpu_custom_call.1} parent=1 // pred_region
      %s45 = ssub.s32 1024, 1024
      %46 = vsyncadd [#allocation6], %s45
      %s47 = sshll.u32 [#allocation7], 4
      %s48 = int_to_ptr.vmem [resolvable:$true] %s47
      %53 = dma.hbm_to_vmem [thread:$0]  %s3, 1024, %s48, [#allocation6], 64, 64, 4
    $region17: #{tpu_custom_call.1} parent=1 // pred_fallthru
      _
    // Predicated region
    $region18: #{tpu_custom_call.1} parent=1 // pred_check
      _
    $region19: #{tpu_custom_call.1} parent=1 // pred_check_branch
      %55 = sbr.rel (0) target = $region21
    $region20: #{tpu_custom_call.1} parent=1 // pred_region
      _
    $region21: #{tpu_custom_call.1} parent=1 // pred_fallthru
      _
    // Predicated region
    $region22: #{tpu_custom_call.1} parent=1 // pred_check
      _
    $region23: #{tpu_custom_call.1} parent=1 // pred_check_branch
      %57 = sbr.rel (0) target = $region25
    $region24: #{tpu_custom_call.1} parent=1 // pred_region
      %s59 = ssub.s32 1024, 1024
      %60 = vsyncadd [#allocation9], %s59
      %s61 = sshll.u32 [#allocation8], 4
      %s62 = int_to_ptr.vmem [resolvable:$true] %s61
      %67 = dma.hbm_to_vmem [thread:$0]  %s5, 1024, %s62, [#allocation9], 64, 64, 4
    $region25: #{tpu_custom_call.1} parent=1 // pred_fallthru
      _
    // Predicated region
    $region26: #{tpu_custom_call.1} parent=1 // pred_check
      _
    $region27: #{tpu_custom_call.1} parent=1 // pred_check_branch
      %69 = sbr.rel (0) target = $region29
    $region28: #{tpu_custom_call.1} parent=1 // pred_region
      _
    $region29: #{tpu_custom_call.1} parent=1 // pred_fallthru
      _
    // Predicated region
    $region30: #{tpu_custom_call.1} parent=1 // pred_check
      _
    $region31: #{tpu_custom_call.1} parent=1 // pred_check_branch
      %71 = sbr.rel (0) target = $region33
    $region32: #{tpu_custom_call.1} parent=1 // pred_region
      %72 = dma.done [#allocation3], 256
    $region33: #{tpu_custom_call.1} parent=1 // pred_fallthru
      _
    // Predicated region
    $region34: #{tpu_custom_call.1} parent=1 // pred_check
      _
    $region35: #{tpu_custom_call.1} parent=1 // pred_check_branch
      %74 = sbr.rel (0) target = $region37
    $region36: #{tpu_custom_call.1} parent=1 // pred_region
      %75 = dma.done [#allocation6], 128
    $region37: #{tpu_custom_call.1} parent=1 // pred_fallthru
      _
    // Predicated region
    $region38: #{tpu_custom_call.1} parent=1 // pred_check
      _
    $region39: #{tpu_custom_call.1} parent=1 // pred_check_branch
      %77 = sbr.rel (0) target = $region41
    $region40: #{tpu_custom_call.1} parent=1 // pred_region
      %78 = dma.done [#allocation6], 1024
    $region41: #{tpu_custom_call.1} parent=1 // pred_fallthru
      _
    // Predicated region
    $region42: #{tpu_custom_call.1} parent=1 // pred_check
      _
    $region43: #{tpu_custom_call.1} parent=1 // pred_check_branch
      %80 = sbr.rel (0) target = $region45
    $region44: #{tpu_custom_call.1} parent=1 // pred_region
      %81 = dma.done [#allocation9], 1024
    $region45: #{tpu_custom_call.1} parent=1 // pred_fallthru
      _
    %v83 = vld [vmem:[#allocation2] sm:$0xff]
    %v84 = vld [vmem:[#allocation2 + $0x8] sm:$0xff]
    %v85 = vpack.c.bf16 %v84, %v83
    %v86 = vld [vmem:[#allocation5] sm:$0xf]
    %v87 = vld [vmem:[#allocation5 + $0x4] sm:$0xf]
    %v88 = vld [vmem:[%s2] sm:$0x1]
    %v90 = vlaneseq
    %v91 = vshrl.u32 %v90, 7
    %v92 = vsub.s32 0, %v91
    %v93 = vrot.slane %v88, %v92
    %v97 = vunpack.c.l.b16 %v86
    %v98 = vunpack.c.l.b16 %v87
    %v99 = vpack.c.b16 %v98, %v97
    %vm101 = vcmask 130048
    %v103 = vsel %vm101, %v85, 0
    %105 = vmatprep.subr.bf16.mxu0 0
    %106 = vmatpush1.bf16.msra.mxu0 0
    %107 = vmatprep.subr.bf16.mxu0 0
    %108 = vmatpush1.bf16.msra.mxu0 0
    %109 = vmatprep.subr.bf16.mxu0 0
    %110 = vmatpush1.bf16.msra.mxu0 0
    %111 = vmatprep.subr.bf16.mxu0 0
    %112 = vmatpush1.bf16.msra.mxu0 0
    %113 = vmatprep.subr.bf16.mxu0 0
    %114 = vmatpush1.bf16.msra.mxu0 0
    %115 = vmatprep.subr.bf16.mxu0 0
    %116 = vmatpush1.bf16.msra.mxu0 0
    %117 = vmatprep.subr.bf16.mxu0 0
    %118 = vmatpush1.bf16.msra.mxu0 0
    %119 = vmatprep.subr.bf16.mxu0 0
    %120 = vmatpush1.bf16.msra.mxu0 %v99
    %121 = vmatprep.subr.bf16.mxu0 0
    %122 = vmatpush2.bf16.msra.mxu0 0
    %123 = vmatprep.subr.bf16.mxu0 0
    %124 = vmatpush2.bf16.msra.mxu0 0
    %125 = vmatprep.subr.bf16.mxu0 0
    %126 = vmatpush2.bf16.msra.mxu0 0
    %127 = vmatprep.subr.bf16.mxu0 0
    %128 = vmatpush2.bf16.msra.mxu0 0
    %129 = vmatprep.subr.bf16.mxu0 0
    %130 = vmatpush2.bf16.msra.mxu0 0
    %131 = vmatprep.subr.bf16.mxu0 0
    %132 = vmatpush2.bf16.msra.mxu0 0
    %133 = vmatprep.subr.bf16.mxu0 0
    %134 = vmatpush2.bf16.msra.mxu0 0
    %135 = vmatprep.subr.bf16.mxu0 0
    %136 = vmatpush2.bf16.msra.mxu0 0
    %137 = vmatprep.mubr.bf16.mxu0 0
    %138 = vmatmul.mubr.bf16.gmra.mxu0 %v103
    %v139 = vpop.f32.mrf.mxu0
    %v140 = vadd.f32 %v93, %v139
    %v141 = vpop.f32.mrf.mxu0
    %v142 = vpop.f32.mrf.mxu0
    %v143 = vadd.f32 %v93, %v142
    %v144 = vpop.f32.mrf.mxu0
    %145 = vdwg.mxu0
    %v146 = vmax.f32 %v140, 0.0
    %v147 = vmax.f32 %v143, 0.0
    %v148 = vpack.c.bf16 %v147, %v146
    %v149 = vld [vmem:[#allocation7] sm:$0xf]
    %v150 = vld [vmem:[#allocation7 + $0x4] sm:$0xf]
    %v151 = vld [vmem:[#allocation7 + $0x8] sm:$0xf]
    %v152 = vld [vmem:[#allocation7 + $0xc] sm:$0xf]
    %v153 = vld [vmem:[#allocation7 + $0x10] sm:$0xf]
    %v154 = vld [vmem:[#allocation7 + $0x14] sm:$0xf]
    %v155 = vld [vmem:[#allocation7 + $0x18] sm:$0xf]
    %v156 = vld [vmem:[#allocation7 + $0x1c] sm:$0xf]
    %v157 = vld [vmem:[#allocation7 + $0x20] sm:$0xf]
    %v158 = vld [vmem:[#allocation7 + $0x24] sm:$0xf]
    %v159 = vld [vmem:[#allocation7 + $0x28] sm:$0xf]
    %v160 = vld [vmem:[#allocation7 + $0x2c] sm:$0xf]
    %v161 = vld [vmem:[#allocation7 + $0x30] sm:$0xf]
    %v162 = vld [vmem:[#allocation7 + $0x34] sm:$0xf]
    %v163 = vld [vmem:[#allocation7 + $0x38] sm:$0xf]
    %v164 = vld [vmem:[#allocation7 + $0x3c] sm:$0xf]
    %v165 = vld [vmem:[%s4] sm:$0x1]
    %v167 = vlaneseq
    %v168 = vshrl.u32 %v167, 7
    %v169 = vsub.s32 0, %v168
    %v170 = vrot.slane %v165, %v169
    %v188 = vunpack.c.l.b16 %v149
    %v189 = vunpack.c.l.b16 %v150
    %v190 = vunpack.c.l.b16 %v151
    %v191 = vunpack.c.l.b16 %v152
    %v192 = vunpack.c.l.b16 %v153
    %v193 = vunpack.c.l.b16 %v154
    %v194 = vunpack.c.l.b16 %v155
    %v195 = vunpack.c.l.b16 %v156
    %v196 = vunpack.c.l.b16 %v157
    %v197 = vunpack.c.l.b16 %v158
    %v198 = vunpack.c.l.b16 %v159
    %v199 = vunpack.c.l.b16 %v160
    %v200 = vunpack.c.l.b16 %v161
    %v201 = vunpack.c.l.b16 %v162
    %v202 = vunpack.c.l.b16 %v163
    %v203 = vunpack.c.l.b16 %v164
    %v204 = vpack.c.b16 %v189, %v188
    %v205 = vpack.c.b16 %v191, %v190
    %v206 = vpack.c.b16 %v193, %v192
    %v207 = vpack.c.b16 %v195, %v194
    %v208 = vpack.c.b16 %v197, %v196
    %v209 = vpack.c.b16 %v199, %v198
    %v210 = vpack.c.b16 %v201, %v200
    %v211 = vpack.c.b16 %v203, %v202
    %220 = vmatprep.subr.bf16.mxu0 0
    %221 = vmatpush1.bf16.msra.mxu0 %v211
    %222 = vmatprep.subr.bf16.mxu0 0
    %223 = vmatpush1.bf16.msra.mxu0 %v210
    %224 = vmatprep.subr.bf16.mxu0 0
    %225 = vmatpush1.bf16.msra.mxu0 %v209
    %226 = vmatprep.subr.bf16.mxu0 0
    %227 = vmatpush1.bf16.msra.mxu0 %v208
    %228 = vmatprep.subr.bf16.mxu0 0
    %229 = vmatpush1.bf16.msra.mxu0 %v207
    %230 = vmatprep.subr.bf16.mxu0 0
    %231 = vmatpush1.bf16.msra.mxu0 %v206
    %232 = vmatprep.subr.bf16.mxu0 0
    %233 = vmatpush1.bf16.msra.mxu0 %v205
    %234 = vmatprep.subr.bf16.mxu0 0
    %235 = vmatpush1.bf16.msra.mxu0 %v204
    %236 = vmatprep.subr.bf16.mxu0 0
    %237 = vmatpush2.bf16.msra.mxu0 0
    %238 = vmatprep.subr.bf16.mxu0 0
    %239 = vmatpush2.bf16.msra.mxu0 0
    %240 = vmatprep.subr.bf16.mxu0 0
    %241 = vmatpush2.bf16.msra.mxu0 0
    %242 = vmatprep.subr.bf16.mxu0 0
    %243 = vmatpush2.bf16.msra.mxu0 0
    %244 = vmatprep.subr.bf16.mxu0 0
    %245 = vmatpush2.bf16.msra.mxu0 0
    %246 = vmatprep.subr.bf16.mxu0 0
    %247 = vmatpush2.bf16.msra.mxu0 0
    %248 = vmatprep.subr.bf16.mxu0 0
    %249 = vmatpush2.bf16.msra.mxu0 0
    %250 = vmatprep.subr.bf16.mxu0 0
    %251 = vmatpush2.bf16.msra.mxu0 0
    %252 = vmatprep.mubr.bf16.mxu0 0
    %253 = vmatmul.mubr.bf16.gmra.mxu0 %v148
    %v254 = vpop.f32.mrf.mxu0
    %v255 = vadd.f32 %v170, %v254
    %v256 = vpop.f32.mrf.mxu0
    %v257 = vpop.f32.mrf.mxu0
    %v258 = vadd.f32 %v170, %v257
    %v259 = vpop.f32.mrf.mxu0
    %260 = vdwg.mxu0
    %v261 = vmax.f32 %v255, 0.0
    %v262 = vmax.f32 %v258, 0.0
    %v263 = vpack.c.bf16 %v262, %v261
    %v264 = vld [vmem:[#allocation8] sm:$0xf]
    %v265 = vld [vmem:[#allocation8 + $0x4] sm:$0xf]
    %v266 = vld [vmem:[#allocation8 + $0x8] sm:$0xf]
    %v267 = vld [vmem:[#allocation8 + $0xc] sm:$0xf]
    %v268 = vld [vmem:[#allocation8 + $0x10] sm:$0xf]
    %v269 = vld [vmem:[#allocation8 + $0x14] sm:$0xf]
    %v270 = vld [vmem:[#allocation8 + $0x18] sm:$0xf]
    %v271 = vld [vmem:[#allocation8 + $0x1c] sm:$0xf]
    %v272 = vld [vmem:[#allocation8 + $0x20] sm:$0xf]
    %v273 = vld [vmem:[#allocation8 + $0x24] sm:$0xf]
    %v274 = vld [vmem:[#allocation8 + $0x28] sm:$0xf]
    %v275 = vld [vmem:[#allocation8 + $0x2c] sm:$0xf]
    %v276 = vld [vmem:[#allocation8 + $0x30] sm:$0xf]
    %v277 = vld [vmem:[#allocation8 + $0x34] sm:$0xf]
    %v278 = vld [vmem:[#allocation8 + $0x38] sm:$0xf]
    %v279 = vld [vmem:[#allocation8 + $0x3c] sm:$0xf]
    %v280 = vld [vmem:[%s6] sm:$0x1]
    %v282 = vlaneseq
    %v283 = vshrl.u32 %v282, 7
    %v284 = vsub.s32 0, %v283
    %v285 = vrot.slane %v280, %v284
    %v303 = vunpack.c.l.b16 %v264
    %v304 = vunpack.c.l.b16 %v265
    %v305 = vunpack.c.l.b16 %v266
    %v306 = vunpack.c.l.b16 %v267
    %v307 = vunpack.c.l.b16 %v268
    %v308 = vunpack.c.l.b16 %v269
    %v309 = vunpack.c.l.b16 %v270
    %v310 = vunpack.c.l.b16 %v271
    %v311 = vunpack.c.l.b16 %v272
    %v312 = vunpack.c.l.b16 %v273
    %v313 = vunpack.c.l.b16 %v274
    %v314 = vunpack.c.l.b16 %v275
    %v315 = vunpack.c.l.b16 %v276
    %v316 = vunpack.c.l.b16 %v277
    %v317 = vunpack.c.l.b16 %v278
    %v318 = vunpack.c.l.b16 %v279
    %v319 = vpack.c.b16 %v304, %v303
    %v320 = vpack.c.b16 %v306, %v305
    %v321 = vpack.c.b16 %v308, %v307
    %v322 = vpack.c.b16 %v310, %v309
    %v323 = vpack.c.b16 %v312, %v311
    %v324 = vpack.c.b16 %v314, %v313
    %v325 = vpack.c.b16 %v316, %v315
    %v326 = vpack.c.b16 %v318, %v317
    %335 = vmatprep.subr.bf16.mxu0 0
    %336 = vmatpush1.bf16.msra.mxu0 %v326
    %337 = vmatprep.subr.bf16.mxu0 0
    %338 = vmatpush1.bf16.msra.mxu0 %v325
    %339 = vmatprep.subr.bf16.mxu0 0
    %340 = vmatpush1.bf16.msra.mxu0 %v324
    %341 = vmatprep.subr.bf16.mxu0 0
    %342 = vmatpush1.bf16.msra.mxu0 %v323
    %343 = vmatprep.subr.bf16.mxu0 0
    %344 = vmatpush1.bf16.msra.mxu0 %v322
    %345 = vmatprep.subr.bf16.mxu0 0
    %346 = vmatpush1.bf16.msra.mxu0 %v321
    %347 = vmatprep.subr.bf16.mxu0 0
    %348 = vmatpush1.bf16.msra.mxu0 %v320
    %349 = vmatprep.subr.bf16.mxu0 0
    %350 = vmatpush1.bf16.msra.mxu0 %v319
    %351 = vmatprep.subr.bf16.mxu0 0
    %352 = vmatpush2.bf16.msra.mxu0 0
    %353 = vmatprep.subr.bf16.mxu0 0
    %354 = vmatpush2.bf16.msra.mxu0 0
    %355 = vmatprep.subr.bf16.mxu0 0
    %356 = vmatpush2.bf16.msra.mxu0 0
    %357 = vmatprep.subr.bf16.mxu0 0
    %358 = vmatpush2.bf16.msra.mxu0 0
    %359 = vmatprep.subr.bf16.mxu0 0
    %360 = vmatpush2.bf16.msra.mxu0 0
    %361 = vmatprep.subr.bf16.mxu0 0
    %362 = vmatpush2.bf16.msra.mxu0 0
    %363 = vmatprep.subr.bf16.mxu0 0
    %364 = vmatpush2.bf16.msra.mxu0 0
    %365 = vmatprep.subr.bf16.mxu0 0
    %366 = vmatpush2.bf16.msra.mxu0 0
    %367 = vmatprep.mubr.bf16.mxu0 0
    %368 = vmatmul.mubr.bf16.gmra.mxu0 %v263
    %v369 = vpop.f32.mrf.mxu0
    %v370 = vadd.f32 %v285, %v369
    %v371 = vpop.f32.mrf.mxu0
    %v372 = vpop.f32.mrf.mxu0
    %v373 = vadd.f32 %v285, %v372
    %v374 = vpop.f32.mrf.mxu0
    %375 = vdwg.mxu0
    %376 = vmax.xlane.f32.xlu0 %v370
    %v377 = vpop.xlane.xlu0 %376
    %378 = vmax.xlane.f32.xlu0 %v373
    %v379 = vpop.xlane.xlu0 %378
    %v380 = vsub.f32 %v370, %v377
    %v381 = vsub.f32 %v373, %v379
    %v382 = vmul.f32 %v380, 1.442695
    %v383 = vpow.pop %v382
    %v384 = vmul.f32 %v381, 1.442695
    %v385 = vpow.pop %v384
    %386 = vadd.xlane.f32.xlu0 %v383
    %v387 = vpop.xlane.xlu0 %386
    %388 = vadd.xlane.f32.xlu0 %v385
    %v389 = vpop.xlane.xlu0 %388
    %v390 = vrcp.pop %v387
    %v391 = vmul.f32 %v383, %v390
    %v392 = vrcp.pop %v389
    %v393 = vmul.f32 %v385, %v392
    %v394 = vpack.c.bf16 %v393, %v391
    %v396 = vunpack.c.l.b16 %v394
    %v397 = vunpack.c.h.b16 %v394
    %v398 = vpack.c.b16 %v396, %v396
    %v399 = vpack.c.b16 %v397, %v397
    %402 = vst [vmem:[#allocation10] sm:$0xf] %v398
    %403 = vst [vmem:[#allocation10 + $0x4] sm:$0xf] %v399
    // Predicated region
    $region46: #{tpu_custom_call.1} parent=1 // pred_check
      _
    $region47: #{tpu_custom_call.1} parent=1 // pred_check_branch
      %405 = sbr.rel (0) target = $region49
    $region48: #{tpu_custom_call.1} parent=1 // pred_region
      %s407 = ssub.s32 128, 128
      %408 = vsyncadd [#allocation4], %s407
      %s409 = sshll.u32 [#allocation10], 4
      %s410 = int_to_ptr.vmem [resolvable:$true] %s409
      %415 = dma.vmem_to_hbm [thread:$0]  %s410, 128, %s7, [#allocation4], 64, 64, 4
    $region49: #{tpu_custom_call.1} parent=1 // pred_fallthru
      _
    // Predicated region
    $region50: #{tpu_custom_call.1} parent=1 // pred_check
      _
    $region51: #{tpu_custom_call.1} parent=1 // pred_check_branch
      %417 = sbr.rel (0) target = $region53
    $region52: #{tpu_custom_call.1} parent=1 // pred_region
      %418 = dma.done [#allocation4], 128
    $region53: #{tpu_custom_call.1} parent=1 // pred_fallthru
      _
    %419 = vsyncpa [#allocation3], 1
    %420 = vsyncpa [#allocation6], 1
    %421 = vsyncpa [#allocation9], 1
    %422 = vsyncpa [#allocation4], 1

</llo_original>
